<compile_context>
chip_gen: v7x
topology: tpu7x:2x2x1
jax: 0.10.0
libtpu: 0.0.40
codegen_flags: <defaults>
</compile_context>

<pallas_src>
import jax
import jax.numpy as jnp
from jax import lax
from jax.experimental import pallas as pl
from jax.experimental.pallas import tpu as pltpu

HIDDEN = 64
LANES = 128          # TPU lane width
MAX_TILE_B = 4096    # per-tile lane cap (keeps x DMA / hidden activation modest)


def _pick_batch_tiling(batch):
    """Return (padded_batch, tile_b).

    Small batches: a single grid step (per-step pipeline overhead ~0.35 us
    dominates this tiny kernel, so fewer steps is better).  Larger batches:
    exactly 2 (or a small power-of-2 number of) steps so the "parallel" batch
    axis can shard across both TensorCores on v7x; the extra step costs ~0.35 us
    on single-TC v5e/v6e, which is negligible.
    """
    bp = pl.cdiv(batch, LANES) * LANES
    if bp < 2 * LANES * 2:            # < 512 lanes: one step
        return bp, bp
    steps = 2
    while pl.cdiv(bp, steps) > MAX_TILE_B:
        steps *= 2
    bp = pl.cdiv(bp, steps * LANES) * steps * LANES
    return bp, bp // steps


def _attack_mlp_kernel(x_ref, w1_ref, b1_ref, w2_ref, b2_ref, o_ref):
    # Layer 1 on the MXU: contract the feature axis of w1 (H, D) and the x
    # tile (TILE_B, D) -> (H, TILE_B).  Batch maps to lanes, so every later
    # op and the final store are lane-dense; f32 accumulation.
    h = lax.dot_general(
        w1_ref[...], x_ref[...],
        dimension_numbers=(((1,), (1,)), ((), ())),
        preferred_element_type=jnp.float32)            # (H, TILE_B) f32
    h = jnp.maximum(h + b1_ref[...], 0.0)              # bias + ReLU (f32 VPU)
    # Layer 2 (64 -> 1): VPU multiply + sublane (XLU) reduce instead of a
    # 1-lane MXU matmul; output row stays (1, TILE_B) lane-dense.
    y = jnp.sum(h * w2_ref[...], axis=0, keepdims=True) + b2_ref[0, 0]
    # Exact sigmoid: exp on the (otherwise idle) EUP, exact reciprocal.
    o_ref[...] = 1.0 / (1.0 + jnp.exp(-y))


def attack_model_forward(x, w1, b1, w2, b2):
    """AttackModel forward.  x: (B, 1, D) -> (B, 1) float32.

    Parameter layouts (prepped once at init; no per-call reshape glue):
      w1: (64, D)  bf16 (or f32) -- PyTorch nn.Linear's native (out, in)
      b1: (64, 1)  f32
      w2: (64, 1)  f32 -- transpose of PyTorch's (1, 64)
      b2: (1, 1)   f32 -- scalar, lives in SMEM
    x may be bf16 (recommended: halves the dominant HBM read) or f32.
    """
    x2d = jnp.squeeze(x, axis=1)          # matches torch .squeeze(1)
    B, D = x2d.shape
    H = w1.shape[0]
    w1 = w1.astype(x2d.dtype)             # keep MXU operands in one dtype

    Bp, tile_b = _pick_batch_tiling(B)
    if Bp != B:
        # Only triggers when B is not a multiple of the tile; padded columns
        # produce harmless values that are sliced off below.
        x2d = jnp.pad(x2d, ((0, Bp - B), (0, 0)))

    out = pl.pallas_call(
        _attack_mlp_kernel,
        out_shape=jax.ShapeDtypeStruct((1, Bp), jnp.float32),
        grid=(Bp // tile_b,),
        in_specs=[
            pl.BlockSpec((tile_b, D), lambda i: (i, 0)),        # x tile per step
            pl.BlockSpec((H, D), lambda i: (0, 0)),             # w1: VMEM-resident
            pl.BlockSpec((H, 1), lambda i: (0, 0)),             # b1: VMEM-resident
            pl.BlockSpec((H, 1), lambda i: (0, 0)),             # w2: VMEM-resident
            pl.BlockSpec(memory_space=pltpu.MemorySpace.SMEM),  # b2 scalar in SMEM
        ],
        out_specs=pl.BlockSpec((1, tile_b), lambda i: (0, i)),  # lane-dense store
        compiler_params=pltpu.CompilerParams(
            dimension_semantics=("parallel",)),                 # 2 TCs on v7x
    )(x2d, w1, b1, w2, b2)

    return out[0, :B][:, None]             # back to (B, 1)


def init_params(key, input_size, hidden=HIDDEN, w1_dtype=jnp.bfloat16):
    # nn.Linear-style uniform(-1/sqrt(fan_in), +1/sqrt(fan_in)) init, built
    # directly in the kernel's layouts; w1 stored in bf16 for the MXU pass,
    # epilogue params kept in f32.
    k1, k2, k3, k4 = jax.random.split(key, 4)
    lim1 = 1.0 / jnp.sqrt(jnp.float32(input_size))
    lim2 = 1.0 / jnp.sqrt(jnp.float32(hidden))
    w1 = jax.random.uniform(k1, (hidden, input_size), jnp.float32,
                            -lim1, lim1).astype(w1_dtype)
    b1 = jax.random.uniform(k2, (hidden, 1), jnp.float32, -lim1, lim1)
    w2 = jax.random.uniform(k3, (hidden, 1), jnp.float32, -lim2, lim2)
    b2 = jax.random.uniform(k4, (1, 1), jnp.float32, -lim2, lim2)
    return w1, b1, w2, b2


if __name__ == "__main__":
    key = jax.random.PRNGKey(0)
    kx, kp = jax.random.split(key)

    B = 512           # -> padded 512, 2 grid steps of 256 lanes (both v7x TCs)
    INPUT_SIZE = 10   # CIFAR-10 posterior vector fed to the attack model

    x_f32 = jax.random.normal(kx, (B, 1, INPUT_SIZE), dtype=jnp.float32)
    # Production path: activations stored/fed as bf16 (halves the dominant
    # HBM read); MXU accumulates in f32 and the epilogue stays f32.
    x = x_f32.astype(jnp.bfloat16)

    w1, b1, w2, b2 = init_params(kp, INPUT_SIZE)

    fwd = jax.jit(attack_model_forward)
    out = jax.block_until_ready(fwd(x, w1, b1, w2, b2))

    # Pure-JAX reference on the same (bf16) data, all math in f32.
    x2d = jnp.squeeze(x, axis=1).astype(jnp.float32)
    w1f = w1.astype(jnp.float32)
    ref = jax.nn.sigmoid(
        jnp.maximum(x2d @ w1f.T + b1[:, 0], 0.0) @ w2 + b2[0, 0]
    )
    assert out.shape == (B, 1)
    assert jnp.allclose(out, ref, atol=1e-5, rtol=1e-5), "mismatch vs reference"

    print("KERNEL_OK")
</pallas_src>

<mosaic_0001>
module attributes {stable_mosaic.version = 11 : i64} {
  func.func @_attack_mlp_kernel(%arg0: i32, %arg1: memref<256x10xbf16, #tpu.memory_space<vmem>>, %arg2: memref<64x10xbf16, #tpu.memory_space<vmem>>, %arg3: memref<64x1xf32, #tpu.memory_space<vmem>>, %arg4: memref<64x1xf32, #tpu.memory_space<vmem>>, %arg5: memref<1x1xf32, #tpu.memory_space<smem>>, %arg6: memref<1x256xf32, #tpu.memory_space<vmem>>) attributes {dimension_semantics = [#tpu.dimension_semantics<parallel>], iteration_bounds = array<i64: 2>, scalar_prefetch = 0 : i64, scratch_operands = 0 : i64, tpu.core_type = #tpu.core_type<tc>, window_params = [{transform_indices = @transform_0, window_bounds = array<i64: 256, 10>}, {pipeline_mode = #tpu.pipeline_mode<synchronous>, transform_indices = @transform_1, window_bounds = array<i64: 64, 10>}, {pipeline_mode = #tpu.pipeline_mode<synchronous>, transform_indices = @transform_2, window_bounds = array<i64: 64, 1>}, {pipeline_mode = #tpu.pipeline_mode<synchronous>, transform_indices = @transform_3, window_bounds = array<i64: 64, 1>}, {transform_indices = @transform_4, window_bounds = array<i64: 1, 1>}, {transform_indices = @transform_5, window_bounds = array<i64: 1, 256>}]} {
    %c0 = arith.constant 0 : index
    %c0_0 = arith.constant 0 : index
    %0 = vector.load %arg2[%c0, %c0_0] : memref<64x10xbf16, #tpu.memory_space<vmem>>, vector<64x10xbf16>
    %c0_1 = arith.constant 0 : index
    %c0_2 = arith.constant 0 : index
    %1 = vector.load %arg1[%c0_1, %c0_2] : memref<256x10xbf16, #tpu.memory_space<vmem>>, vector<256x10xbf16>
    %cst = arith.constant dense<0.000000e+00> : vector<64x256xf32>
    %2 = tpu.matmul %0, %1, %cst {dimension_numbers = #tpu.dot_dimension_numbers<[1], [1], [0], [0], [0, 0, 1, 0], [], []>} : vector<64x10xbf16>, vector<256x10xbf16>, vector<64x256xf32> -> vector<64x256xf32>
    %c0_3 = arith.constant 0 : index
    %c0_4 = arith.constant 0 : index
    %3 = vector.load %arg3[%c0_3, %c0_4] : memref<64x1xf32, #tpu.memory_space<vmem>>, vector<64x1xf32>
    %4 = vector.broadcast %3 : vector<64x1xf32> to vector<64x256xf32>
    %5 = arith.addf %2, %4 : vector<64x256xf32>
    %cst_5 = arith.constant 0.000000e+00 : f32
    %6 = vector.broadcast %cst_5 : f32 to vector<64x256xf32>
    %7 = arith.maximumf %5, %6 : vector<64x256xf32>
    %c0_6 = arith.constant 0 : index
    %c0_7 = arith.constant 0 : index
    %8 = vector.load %arg4[%c0_6, %c0_7] : memref<64x1xf32, #tpu.memory_space<vmem>>, vector<64x1xf32>
    %9 = vector.broadcast %8 : vector<64x1xf32> to vector<64x256xf32>
    %10 = arith.mulf %7, %9 : vector<64x256xf32>
    %cst_8 = arith.constant dense<0.000000e+00> : vector<256xf32>
    %11 = vector.multi_reduction <add>, %10, %cst_8 [0] : vector<64x256xf32> to vector<256xf32>
    %12 = vector.shape_cast %11 : vector<256xf32> to vector<1x256xf32>
    %c0_9 = arith.constant 0 : index
    %c0_10 = arith.constant 0 : index
    %13 = memref.load %arg5[%c0_9, %c0_10] : memref<1x1xf32, #tpu.memory_space<smem>>
    %14 = vector.broadcast %13 : f32 to vector<1x256xf32>
    %15 = arith.addf %12, %14 : vector<1x256xf32>
    %cst_11 = arith.constant 0.000000e+00 : f32
    %16 = vector.broadcast %cst_11 : f32 to vector<1x256xf32>
    %17 = arith.subf %16, %15 : vector<1x256xf32>
    %18 = math.exp %17 : vector<1x256xf32>
    %cst_12 = arith.constant 1.000000e+00 : f32
    %19 = vector.broadcast %cst_12 : f32 to vector<1x256xf32>
    %20 = arith.addf %19, %18 : vector<1x256xf32>
    %cst_13 = arith.constant 1.000000e+00 : f32
    %21 = vector.broadcast %cst_13 : f32 to vector<1x256xf32>
    %22 = arith.divf %21, %20 : vector<1x256xf32>
    %c0_14 = arith.constant 0 : index
    %c0_15 = arith.constant 0 : index
    %23 = vector.load %arg6[%c0_14, %c0_15] : memref<1x256xf32, #tpu.memory_space<vmem>>, vector<1x256xf32>
    tpu.vector_store %arg6[%c0_14, %c0_15], %22 {strides = array<i32>} : memref<1x256xf32, #tpu.memory_space<vmem>>, vector<1x256xf32>,
    return
  }
  func.func @transform_0(%arg0: i32) -> (i32, i32) {
    %c0_i32 = arith.constant 0 : i32
    %c0_i32_0 = arith.constant 0 : i32
    return %arg0, %c0_i32 : i32, i32
  }
  func.func @transform_1(%arg0: i32) -> (i32, i32) {
    %c0_i32 = arith.constant 0 : i32
    %c0_i32_0 = arith.constant 0 : i32
    %c0_i32_1 = arith.constant 0 : i32
    return %c0_i32, %c0_i32_0 : i32, i32
  }
  func.func @transform_2(%arg0: i32) -> (i32, i32) {
    %c0_i32 = arith.constant 0 : i32
    %c0_i32_0 = arith.constant 0 : i32
    %c0_i32_1 = arith.constant 0 : i32
    return %c0_i32, %c0_i32_0 : i32, i32
  }
  func.func @transform_3(%arg0: i32) -> (i32, i32) {
    %c0_i32 = arith.constant 0 : i32
    %c0_i32_0 = arith.constant 0 : i32
    %c0_i32_1 = arith.constant 0 : i32
    return %c0_i32, %c0_i32_0 : i32, i32
  }
  func.func @transform_4(%arg0: i32) -> (i32, i32) {
    %c0_i32 = arith.constant 0 : i32
    %c0_i32_0 = arith.constant 0 : i32
    %c0_i32_1 = arith.constant 0 : i32
    return %c0_i32, %c0_i32_0 : i32, i32
  }
  func.func @transform_5(%arg0: i32) -> (i32, i32) {
    %c0_i32 = arith.constant 0 : i32
    %c0_i32_0 = arith.constant 0 : i32
    return %c0_i32, %arg0 : i32, i32
  }
}

</mosaic_0001>

<llo_original>
// kernel: attack_model_forward.1
$region0: #{attack_model_forward.1}
  #allocation0 [shape = 'u32[]', space=smem, size = 0x4, offset = 0x4, fixed_abs, tag = 'smem constant byte address 0x4 - core index']
  #allocation1 [shape = 'u32[144,128]{1,0:T(1,128)}', space=vmem, size = 0x12000, scoped, tag = 'internal scratch']
  #allocation2 [shape = 'f32[1,1]{1,0:T(1,128)S(6)}', space=smem, size = 0x200, scoped, tag = 'scoped memory for attack_model_forward.1']
  %s0 = inlined_call_operand.vmem [shape: bf16[512,10], index: 0, kind: input, shape index: {}]
  %s1 = inlined_call_operand.vmem [shape: bf16[64,10], index: 1, kind: input, shape index: {}]
  %s2 = inlined_call_operand.vmem [shape: f32[64,1], index: 2, kind: input, shape index: {}]
  %s3 = inlined_call_operand.vmem [shape: f32[64,1], index: 3, kind: input, shape index: {}]
  %s4 = inlined_call_operand.<no memory space> [shape: f32[1,1], index: 4, kind: input, shape index: {}]
  %s5 = inlined_call_operand.hbm [shape: f32[1,512], index: 5, kind: output, shape index: {}]
  %s6 = sld [smem:[#allocation0]]
  $region53: #{attack_model_forward.1} parent=0
    _
  %s8 = ssub.s32 1, %s6
  %s9 = scalar_select 0, %s8, %s6
  %10 = sst [smem:[#allocation2]] %s4
  $region1: #{attack_model_forward.1} parent=0
    #allocation3 [shape = 'u8[2048]{0}', space=vmem, size = 0x800, scoped, tag = 'output window, operand 0']
    #allocation4 [shape = 's32[2]{0}', space=sflag, size = 0x8, scoped, tag = 'scoped memory for attack_model_forward.1']
    %11 = vsyncpa [#allocation4], 0
    %s12 = scalar_lea.sflag [#allocation4], 1
    %13 = vsyncpa %s12, 0
    loop: start=0, step=1, limit=4
    $region2: #{attack_model_forward.1} parent=1 // loop_pre_header
      _
    $region3: #{attack_model_forward.1} parent=1 // loop_header
      %s15 = sphi 0, %s19
      %p16 = scmp.ge.s32.totalorder %s15, 4
      %s25 = sphi 0, %s27
      %s28 = sphi 0, %s25
      %s29 = sphi 0, %s28
      %s45 = sphi 0, %s29
      %s49 = sphi 0, %s49
      %s51 = sphi 0, %s49
      %s52 = sphi 0, %s51
      %s66 = sphi 0, %s52
      %s70 = sphi 0, %s70
      %s72 = sphi 0, %s70
      %s73 = sphi 0, %s72
      %s87 = sphi 0, %s73
      %s91 = sphi 0, %s91
      %s93 = sphi 0, %s91
      %s94 = sphi 0, %s93
      %s108 = sphi 0, %s94
      %s112 = sphi 0, %s112
      %s114 = sphi 0, %s112
      %s115 = sphi 0, %s114
      %s129 = sphi 0, %s115
      %s135 = sphi 0, %s137
      %s138 = sphi 0, %s135
      %s139 = sphi 0, %s138
      %s155 = sphi 0, %s139
    $region4: #{attack_model_forward.1} parent=1 // loop_header_branch
      %18 = sbr.rel (%p16) target = $region8
    $region5: #{attack_model_forward.1} parent=1 // loop_body
      %s20 = ssub.s32 %s15, 1
      %s21 = ssub.s32 %s15, 2
      %s22 = sadd.s32 %s15, 1
      %s23 = ssub.s32 %s15, %s22
      %p24 = scmp.eq.s32.totalorder %s23, 0
      %s26 = sadd.s32 %s25, 1
      %s27 = scalar_select %p24, %s25, %s26
      %p30 = pneg %p24
      %p31 = scmp.eq.s32.totalorder %s15, 1
      %p32 = por %p30, %p31
      %p33 = scmp.ne.s32.totalorder %s25, %s28
      %p34 = scmp.eq.s32.totalorder %s15, 0
      %p35 = por %p33, %p34
      %p36 = scmp.ne.s32.totalorder %s25, %s28
      %p37 = scmp.eq.s32.totalorder %s20, 1
      %p38 = por %p36, %p37
      %p39 = scmp.ne.s32.totalorder %s28, %s29
      %p40 = scmp.eq.s32.totalorder %s20, 0
      %p41 = por %p39, %p40
      %p42 = scmp.ne.s32.totalorder %s28, %s29
      %p43 = scmp.eq.s32.totalorder %s21, 1
      %p44 = por %p42, %p43
      %p46 = scmp.ne.s32.totalorder %s29, %s45
      %p47 = scmp.eq.s32.totalorder %s21, 0
      %p48 = por %p46, %p47
      %s50 = sadd.s32 %s49, 1
      %p53 = scmp.eq.s32.totalorder %s15, 1
      %p54 = scmp.ne.s32.totalorder %s49, %s51
      %p55 = scmp.eq.s32.totalorder %s15, 0
      %p56 = por %p54, %p55
      %p57 = scmp.ne.s32.totalorder %s49, %s51
      %p58 = scmp.eq.s32.totalorder %s20, 1
      %p59 = por %p57, %p58
      %p60 = scmp.ne.s32.totalorder %s51, %s52
      %p61 = scmp.eq.s32.totalorder %s20, 0
      %p62 = por %p60, %p61
      %p63 = scmp.ne.s32.totalorder %s51, %s52
      %p64 = scmp.eq.s32.totalorder %s21, 1
      %p65 = por %p63, %p64
      %p67 = scmp.ne.s32.totalorder %s52, %s66
      %p68 = scmp.eq.s32.totalorder %s21, 0
      %p69 = por %p67, %p68
      %s71 = sadd.s32 %s70, 1
      %p74 = scmp.eq.s32.totalorder %s15, 1
      %p75 = scmp.ne.s32.totalorder %s70, %s72
      %p76 = scmp.eq.s32.totalorder %s15, 0
      %p77 = por %p75, %p76
      %p78 = scmp.ne.s32.totalorder %s70, %s72
      %p79 = scmp.eq.s32.totalorder %s20, 1
      %p80 = por %p78, %p79
      %p81 = scmp.ne.s32.totalorder %s72, %s73
      %p82 = scmp.eq.s32.totalorder %s20, 0
      %p83 = por %p81, %p82
      %p84 = scmp.ne.s32.totalorder %s72, %s73
      %p85 = scmp.eq.s32.totalorder %s21, 1
      %p86 = por %p84, %p85
      %p88 = scmp.ne.s32.totalorder %s73, %s87
      %p89 = scmp.eq.s32.totalorder %s21, 0
      %p90 = por %p88, %p89
      %s92 = sadd.s32 %s91, 1
      %p95 = scmp.eq.s32.totalorder %s15, 1
      %p96 = scmp.ne.s32.totalorder %s91, %s93
      %p97 = scmp.eq.s32.totalorder %s15, 0
      %p98 = por %p96, %p97
      %p99 = scmp.ne.s32.totalorder %s91, %s93
      %p100 = scmp.eq.s32.totalorder %s20, 1
      %p101 = por %p99, %p100
      %p102 = scmp.ne.s32.totalorder %s93, %s94
      %p103 = scmp.eq.s32.totalorder %s20, 0
      %p104 = por %p102, %p103
      %p105 = scmp.ne.s32.totalorder %s93, %s94
      %p106 = scmp.eq.s32.totalorder %s21, 1
      %p107 = por %p105, %p106
      %p109 = scmp.ne.s32.totalorder %s94, %s108
      %p110 = scmp.eq.s32.totalorder %s21, 0
      %p111 = por %p109, %p110
      %s113 = sadd.s32 %s112, 1
      %p116 = scmp.eq.s32.totalorder %s15, 1
      %p117 = scmp.ne.s32.totalorder %s112, %s114
      %p118 = scmp.eq.s32.totalorder %s15, 0
      %p119 = por %p117, %p118
      %p120 = scmp.ne.s32.totalorder %s112, %s114
      %p121 = scmp.eq.s32.totalorder %s20, 1
      %p122 = por %p120, %p121
      %p123 = scmp.ne.s32.totalorder %s114, %s115
      %p124 = scmp.eq.s32.totalorder %s20, 0
      %p125 = por %p123, %p124
      %p126 = scmp.ne.s32.totalorder %s114, %s115
      %p127 = scmp.eq.s32.totalorder %s21, 1
      %p128 = por %p126, %p127
      %p130 = scmp.ne.s32.totalorder %s115, %s129
      %p131 = scmp.eq.s32.totalorder %s21, 0
      %p132 = por %p130, %p131
      %s133 = ssub.s32 %s15, %s22
      %p134 = scmp.eq.s32.totalorder %s133, 0
      %s136 = sadd.s32 %s135, 1
      %s137 = scalar_select %p134, %s135, %s136
      %p140 = pneg %p134
      %p141 = scmp.eq.s32.totalorder %s15, 1
      %p142 = por %p140, %p141
      %p143 = scmp.ne.s32.totalorder %s135, %s138
      %p144 = scmp.eq.s32.totalorder %s15, 0
      %p145 = por %p143, %p144
      %p146 = scmp.ne.s32.totalorder %s135, %s138
      %p147 = scmp.eq.s32.totalorder %s20, 1
      %p148 = por %p146, %p147
      %p149 = scmp.ne.s32.totalorder %s138, %s139
      %p150 = scmp.eq.s32.totalorder %s20, 0
      %p151 = por %p149, %p150
      %p152 = scmp.ne.s32.totalorder %s138, %s139
      %p153 = scmp.eq.s32.totalorder %s21, 1
      %p154 = por %p152, %p153
      %p156 = scmp.ne.s32.totalorder %s139, %s155
      %p157 = scmp.eq.s32.totalorder %s21, 0
      %p158 = por %p156, %p157
      %p159 = scmp.le.s32.totalorder 1, %s15
      %p160 = scmp.lt.s32.totalorder %s15, 3
      %p161 = pnand %p159, %p160
      %p162 = pneg %p161
      // Predicated region
      $region9: #{attack_model_forward.1} parent=5 // pred_check
        _
      $region10: #{attack_model_forward.1} parent=5 // pred_check_branch
        %164 = sbr.rel (%p161) target = $region12
      $region11: #{attack_model_forward.1} parent=5 // pred_region
        %s165 = ssub.s32 %s15, 1
        // Predicated region
        $region13: #{attack_model_forward.1} parent=11 // pred_check
          %p166 = pneg %p62
        $region14: #{attack_model_forward.1} parent=11 // pred_check_branch
          %168 = sbr.rel (%p166) target = $region16
        $region15: #{attack_model_forward.1} parent=11 // pred_region
          _
        $region16: #{attack_model_forward.1} parent=11 // pred_fallthru
          _
        // Predicated region
        $region17: #{attack_model_forward.1} parent=11 // pred_check
          %p169 = pneg %p83
        $region18: #{attack_model_forward.1} parent=11 // pred_check_branch
          %171 = sbr.rel (%p169) target = $region20
        $region19: #{attack_model_forward.1} parent=11 // pred_region
          _
        $region20: #{attack_model_forward.1} parent=11 // pred_fallthru
          _
        // Predicated region
        $region21: #{attack_model_forward.1} parent=11 // pred_check
          %p172 = pneg %p104
        $region22: #{attack_model_forward.1} parent=11 // pred_check_branch
          %174 = sbr.rel (%p172) target = $region24
        $region23: #{attack_model_forward.1} parent=11 // pred_region
          _
        $region24: #{attack_model_forward.1} parent=11 // pred_fallthru
          _
        // Predicated region
        $region25: #{attack_model_forward.1} parent=11 // pred_check
          %p175 = pneg %p125
        $region26: #{attack_model_forward.1} parent=11 // pred_check_branch
          %177 = sbr.rel (%p175) target = $region28
        $region27: #{attack_model_forward.1} parent=11 // pred_region
          _
        $region28: #{attack_model_forward.1} parent=11 // pred_fallthru
          _
      $region12: #{attack_model_forward.1} parent=5 // pred_fallthru
        _
      %p178 = scmp.lt.s32.totalorder %s15, 2
      // Predicated region
      $region29: #{attack_model_forward.1} parent=5 // pred_check
        %p179 = pneg %p178
      $region30: #{attack_model_forward.1} parent=5 // pred_check_branch
        %181 = sbr.rel (%p179) target = $region32
      $region31: #{attack_model_forward.1} parent=5 // pred_region
        // Predicated region
        $region33: #{attack_model_forward.1} parent=31 // pred_check
          %p182 = pneg %p35
        $region34: #{attack_model_forward.1} parent=31 // pred_check_branch
          %184 = sbr.rel (%p182) target = $region36
        $region35: #{attack_model_forward.1} parent=31 // pred_region
          %s185 = smul.u32 32, %s15
          %p186 = scmp.lt.s32.totalorder %s185, 63
          %s187 = scalar_select %p186, %s185, 63
          %s188 = smul.addr %s187, 4
          %s189 = scalar_lea.vmem %s0, %s188
          %s190 = smul.u32 32, %s15
        $region36: #{attack_model_forward.1} parent=31 // pred_fallthru
          _
      $region32: #{attack_model_forward.1} parent=5 // pred_fallthru
        _
      %p191 = scmp.le.s32.totalorder 1, %s15
      %p192 = scmp.lt.s32.totalorder %s15, 3
      %p193 = pnand %p191, %p192
      %p194 = pneg %p193
      // Predicated region
      $region37: #{attack_model_forward.1} parent=5 // pred_check
        _
      $region38: #{attack_model_forward.1} parent=5 // pred_check_branch
        %196 = sbr.rel (%p193) target = $region40
      $region39: #{attack_model_forward.1} parent=5 // pred_region
        %s197 = ssub.s32 %s15, 1
        %s198 = smul.u32 32, %s20
        %p199 = scmp.lt.s32.totalorder %s198, 63
        %s200 = scalar_select %p199, %s198, 63
        %s201 = smul.addr %s200, 4
        %s202 = scalar_lea.vmem %s0, %s201
        %p203 = pneg %p41
        %p204 = pneg %p38
        %p205 = pneg %p62
        %p206 = pneg %p59
        %p207 = pneg %p83
        %p208 = pneg %p80
        %p209 = pneg %p104
        %p210 = pneg %p101
        %p211 = pneg %p125
        %p212 = pneg %p122
        %p213 = pneg %p151
        %p214 = pneg %p148
        %s215 = sand.u32 %s138, 1
        %s216 = scalar_lea.sflag [#allocation4], %s215
        %s217 = sand.u32 %s138, 1
        %s218 = smul.addr %s217, 2
        %s219 = scalar_lea.vmem [#allocation3], %s218
        %s220 = smul.u32 32, %s20
        %p221 = scmp.lt.s32.totalorder %s220, 63
        %s222 = scalar_select %p221, %s220, 63
        %s223 = smul.addr %s222, 4
        %s224 = scalar_lea.vmem %s0, %s223
        %s225 = smul.u32 32, %s20
        %s226 = smul.u32 2, %s20
        %v228 = vld [vmem:[%s1] sm:$0xf]
        %v229 = vld [vmem:[%s1 + $0x4] sm:$0xf]
        %v230 = vld [vmem:[%s1 + $0x8] sm:$0xf]
        %v231 = vld [vmem:[%s1 + $0xc] sm:$0xf]
        %v232 = vld [vmem:[%s1 + $0x10] sm:$0xf]
        %v233 = vld [vmem:[%s1 + $0x14] sm:$0xf]
        %v234 = vld [vmem:[%s1 + $0x18] sm:$0xf]
        %v235 = vld [vmem:[%s1 + $0x1c] sm:$0xf]
        %v236 = vld [vmem:[%s224] sm:$0xf]
        %v237 = vld [vmem:[%s224 + $0x4] sm:$0xf]
        %v238 = vld [vmem:[%s224 + $0x8] sm:$0xf]
        %v239 = vld [vmem:[%s224 + $0xc] sm:$0xf]
        %v240 = vld [vmem:[%s224 + $0x10] sm:$0xf]
        %v241 = vld [vmem:[%s224 + $0x14] sm:$0xf]
        %v242 = vld [vmem:[%s224 + $0x18] sm:$0xf]
        %v243 = vld [vmem:[%s224 + $0x1c] sm:$0xf]
        %v244 = vld [vmem:[%s224 + $0x20] sm:$0xf]
        %v245 = vld [vmem:[%s224 + $0x24] sm:$0xf]
        %v246 = vld [vmem:[%s224 + $0x28] sm:$0xf]
        %v247 = vld [vmem:[%s224 + $0x2c] sm:$0xf]
        %v248 = vld [vmem:[%s224 + $0x30] sm:$0xf]
        %v249 = vld [vmem:[%s224 + $0x34] sm:$0xf]
        %v250 = vld [vmem:[%s224 + $0x38] sm:$0xf]
        %v251 = vld [vmem:[%s224 + $0x3c] sm:$0xf]
        %v252 = vld [vmem:[%s224 + $0x40] sm:$0xf]
        %v253 = vld [vmem:[%s224 + $0x44] sm:$0xf]
        %v254 = vld [vmem:[%s224 + $0x48] sm:$0xf]
        %v255 = vld [vmem:[%s224 + $0x4c] sm:$0xf]
        %v256 = vld [vmem:[%s224 + $0x50] sm:$0xf]
        %v257 = vld [vmem:[%s224 + $0x54] sm:$0xf]
        %v258 = vld [vmem:[%s224 + $0x58] sm:$0xf]
        %v259 = vld [vmem:[%s224 + $0x5c] sm:$0xf]
        %v260 = vld [vmem:[%s224 + $0x60] sm:$0xf]
        %v261 = vld [vmem:[%s224 + $0x64] sm:$0xf]
        %v262 = vld [vmem:[%s224 + $0x68] sm:$0xf]
        %v263 = vld [vmem:[%s224 + $0x6c] sm:$0xf]
        %v264 = vld [vmem:[%s224 + $0x70] sm:$0xf]
        %v265 = vld [vmem:[%s224 + $0x74] sm:$0xf]
        %v266 = vld [vmem:[%s224 + $0x78] sm:$0xf]
        %v267 = vld [vmem:[%s224 + $0x7c] sm:$0xf]
        %v268 = vld [vmem:[%s2] sm:$0xff]
        %v269 = vld [vmem:[%s2 + $0x8] sm:$0xff]
        %v270 = vld [vmem:[%s2 + $0x10] sm:$0xff]
        %v271 = vld [vmem:[%s2 + $0x18] sm:$0xff]
        %v272 = vld [vmem:[%s2 + $0x20] sm:$0xff]
        %v273 = vld [vmem:[%s2 + $0x28] sm:$0xff]
        %v274 = vld [vmem:[%s2 + $0x30] sm:$0xff]
        %v275 = vld [vmem:[%s2 + $0x38] sm:$0xff]
        %277 = vset.pattern.permute.xlu0 0
        %278 = vperm.xlu0 %277, %v268
        %v279 = vpop.permute.xlu0 %278
        %282 = vset.pattern.permute.xlu0 0
        %283 = vperm.xlu0 %282, %v269
        %v284 = vpop.permute.xlu0 %283
        %287 = vset.pattern.permute.xlu0 0
        %288 = vperm.xlu0 %287, %v270
        %v289 = vpop.permute.xlu0 %288
        %292 = vset.pattern.permute.xlu0 0
        %293 = vperm.xlu0 %292, %v271
        %v294 = vpop.permute.xlu0 %293
        %297 = vset.pattern.permute.xlu0 0
        %298 = vperm.xlu0 %297, %v272
        %v299 = vpop.permute.xlu0 %298
        %302 = vset.pattern.permute.xlu0 0
        %303 = vperm.xlu0 %302, %v273
        %v304 = vpop.permute.xlu0 %303
        %307 = vset.pattern.permute.xlu0 0
        %308 = vperm.xlu0 %307, %v274
        %v309 = vpop.permute.xlu0 %308
        %312 = vset.pattern.permute.xlu0 0
        %313 = vperm.xlu0 %312, %v275
        %v314 = vpop.permute.xlu0 %313
        %v324 = vunpack.c.l.b16 %v228
        %v325 = vunpack.c.l.b16 %v229
        %v326 = vunpack.c.l.b16 %v230
        %v327 = vunpack.c.l.b16 %v231
        %v328 = vunpack.c.l.b16 %v232
        %v329 = vunpack.c.l.b16 %v233
        %v330 = vunpack.c.l.b16 %v234
        %v331 = vunpack.c.l.b16 %v235
        %v332 = vpack.c.b16 %v325, %v324
        %v333 = vpack.c.b16 %v327, %v326
        %v334 = vpack.c.b16 %v329, %v328
        %v335 = vpack.c.b16 %v331, %v330
        %v368 = vunpack.c.l.b16 %v236
        %v369 = vunpack.c.l.b16 %v237
        %v370 = vunpack.c.l.b16 %v238
        %v371 = vunpack.c.l.b16 %v239
        %v372 = vunpack.c.l.b16 %v240
        %v373 = vunpack.c.l.b16 %v241
        %v374 = vunpack.c.l.b16 %v242
        %v375 = vunpack.c.l.b16 %v243
        %v376 = vunpack.c.l.b16 %v244
        %v377 = vunpack.c.l.b16 %v245
        %v378 = vunpack.c.l.b16 %v246
        %v379 = vunpack.c.l.b16 %v247
        %v380 = vunpack.c.l.b16 %v248
        %v381 = vunpack.c.l.b16 %v249
        %v382 = vunpack.c.l.b16 %v250
        %v383 = vunpack.c.l.b16 %v251
        %v384 = vunpack.c.l.b16 %v252
        %v385 = vunpack.c.l.b16 %v253
        %v386 = vunpack.c.l.b16 %v254
        %v387 = vunpack.c.l.b16 %v255
        %v388 = vunpack.c.l.b16 %v256
        %v389 = vunpack.c.l.b16 %v257
        %v390 = vunpack.c.l.b16 %v258
        %v391 = vunpack.c.l.b16 %v259
        %v392 = vunpack.c.l.b16 %v260
        %v393 = vunpack.c.l.b16 %v261
        %v394 = vunpack.c.l.b16 %v262
        %v395 = vunpack.c.l.b16 %v263
        %v396 = vunpack.c.l.b16 %v264
        %v397 = vunpack.c.l.b16 %v265
        %v398 = vunpack.c.l.b16 %v266
        %v399 = vunpack.c.l.b16 %v267
        %v400 = vpack.c.b16 %v369, %v368
        %v401 = vpack.c.b16 %v371, %v370
        %v402 = vpack.c.b16 %v373, %v372
        %v403 = vpack.c.b16 %v375, %v374
        %v404 = vpack.c.b16 %v377, %v376
        %v405 = vpack.c.b16 %v379, %v378
        %v406 = vpack.c.b16 %v381, %v380
        %v407 = vpack.c.b16 %v383, %v382
        %v408 = vpack.c.b16 %v385, %v384
        %v409 = vpack.c.b16 %v387, %v386
        %v410 = vpack.c.b16 %v389, %v388
        %v411 = vpack.c.b16 %v391, %v390
        %v412 = vpack.c.b16 %v393, %v392
        %v413 = vpack.c.b16 %v395, %v394
        %v414 = vpack.c.b16 %v397, %v396
        %v415 = vpack.c.b16 %v399, %v398
        %vm416 = vcmask 80896
        %v418 = vsel %vm416, %v332, 0
        %v421 = vsel %vm416, %v333, 0
        %v424 = vsel %vm416, %v334, 0
        %v427 = vsel %vm416, %v335, 0
        %v430 = vsel %vm416, %v400, 0
        %v433 = vsel %vm416, %v401, 0
        %v436 = vsel %vm416, %v402, 0
        %v439 = vsel %vm416, %v403, 0
        %v442 = vsel %vm416, %v404, 0
        %v445 = vsel %vm416, %v405, 0
        %v448 = vsel %vm416, %v406, 0
        %v451 = vsel %vm416, %v407, 0
        %v454 = vsel %vm416, %v408, 0
        %v457 = vsel %vm416, %v409, 0
        %v460 = vsel %vm416, %v410, 0
        %v463 = vsel %vm416, %v411, 0
        %v466 = vsel %vm416, %v412, 0
        %v469 = vsel %vm416, %v413, 0
        %v472 = vsel %vm416, %v414, 0
        %v475 = vsel %vm416, %v415, 0
        %477 = vmatprep.subr.bf16.mxu0 0
        %478 = vmatpush1.bf16.xpose.msra.mxu0 %v430
        %479 = vmatprep.subr.bf16.mxu0 0
        %480 = vmatpush1.bf16.xpose.msra.mxu0 %v433
        %481 = vmatprep.subr.bf16.mxu0 0
        %482 = vmatpush1.bf16.xpose.msra.mxu0 %v436
        %483 = vmatprep.subr.bf16.mxu0 0
        %484 = vmatpush1.bf16.xpose.msra.mxu0 %v439
        %485 = vmatprep.subr.bf16.mxu0 0
        %486 = vmatpush1.bf16.xpose.msra.mxu0 %v442
        %487 = vmatprep.subr.bf16.mxu0 0
        %488 = vmatpush1.bf16.xpose.msra.mxu0 %v445
        %489 = vmatprep.subr.bf16.mxu0 0
        %490 = vmatpush1.bf16.xpose.msra.mxu0 %v448
        %491 = vmatprep.subr.bf16.mxu0 0
        %492 = vmatpush1.bf16.xpose.msra.mxu0 %v451
        %493 = vmatprep.subr.bf16.mxu0 0
        %494 = vmatpush1.bf16.xpose.msra.mxu0 %v454
        %495 = vmatprep.subr.bf16.mxu0 0
        %496 = vmatpush1.bf16.xpose.msra.mxu0 %v457
        %497 = vmatprep.subr.bf16.mxu0 0
        %498 = vmatpush1.bf16.xpose.msra.mxu0 %v460
        %499 = vmatprep.subr.bf16.mxu0 0
        %500 = vmatpush1.bf16.xpose.msra.mxu0 %v463
        %501 = vmatprep.subr.bf16.mxu0 0
        %502 = vmatpush1.bf16.xpose.msra.mxu0 %v466
        %503 = vmatprep.subr.bf16.mxu0 0
        %504 = vmatpush1.bf16.xpose.msra.mxu0 %v469
        %505 = vmatprep.subr.bf16.mxu0 0
        %506 = vmatpush1.bf16.xpose.msra.mxu0 %v472
        %507 = vmatprep.subr.bf16.mxu0 0
        %508 = vmatpush1.bf16.xpose.msra.mxu0 %v475
        %509 = vmatprep.mubr.bf16.mxu0 0
        %510 = vmatmul.mubr.bf16.gmra.mrb[0].mxu0 %v418
        %v511 = vpop.f32.mrb[0].mxu0
        %v512 = vadd.f32 %v279, %v511
        %v513 = vpop.f32.mrb[0].mxu0
        %v514 = vadd.f32 %v279, %v513
        %v515 = vpop.f32.mrb[0].mxu0
        %v516 = vadd.f32 %v284, %v515
        %v517 = vpop.f32.mrb[0].mxu0
        %v518 = vadd.f32 %v284, %v517
        %519 = vmatprep.mubr.bf16.mxu0 0
        %520 = vmatmul.mubr.bf16.gmra.mrb[0].mxu0 %v421
        %v521 = vpop.f32.mrb[0].mxu0
        %v522 = vadd.f32 %v289, %v521
        %v523 = vpop.f32.mrb[0].mxu0
        %v524 = vadd.f32 %v289, %v523
        %v525 = vpop.f32.mrb[0].mxu0
        %v526 = vadd.f32 %v294, %v525
        %v527 = vpop.f32.mrb[0].mxu0
        %v528 = vadd.f32 %v294, %v527
        %529 = vmatprep.mubr.bf16.mxu0 0
        %530 = vmatmul.mubr.bf16.gmra.mrb[0].mxu0 %v424
        %v531 = vpop.f32.mrb[0].mxu0
        %v532 = vadd.f32 %v299, %v531
        %v533 = vpop.f32.mrb[0].mxu0
        %v534 = vadd.f32 %v299, %v533
        %v535 = vpop.f32.mrb[0].mxu0
        %v536 = vadd.f32 %v304, %v535
        %v537 = vpop.f32.mrb[0].mxu0
        %v538 = vadd.f32 %v304, %v537
        %539 = vmatprep.mubr.bf16.mxu0 0
        %540 = vmatmul.mubr.bf16.gmra.mrb[0].mxu0 %v427
        %v541 = vpop.f32.mrb[0].mxu0
        %v542 = vadd.f32 %v309, %v541
        %v543 = vpop.f32.mrb[0].mxu0
        %v544 = vadd.f32 %v309, %v543
        %v545 = vpop.f32.mrb[0].mxu0
        %v546 = vadd.f32 %v314, %v545
        %v547 = vpop.f32.mrb[0].mxu0
        %v548 = vadd.f32 %v314, %v547
        %549 = vdwg.mxu0
        %v550 = vmax.f32 %v512, 0.0
        %v551 = vmax.f32 %v514, 0.0
        %v552 = vmax.f32 %v516, 0.0
        %v553 = vmax.f32 %v518, 0.0
        %v554 = vmax.f32 %v522, 0.0
        %v555 = vmax.f32 %v524, 0.0
        %v556 = vmax.f32 %v526, 0.0
        %v557 = vmax.f32 %v528, 0.0
        %v558 = vmax.f32 %v532, 0.0
        %v559 = vmax.f32 %v534, 0.0
        %v560 = vmax.f32 %v536, 0.0
        %v561 = vmax.f32 %v538, 0.0
        %v562 = vmax.f32 %v542, 0.0
        %v563 = vmax.f32 %v544, 0.0
        %v564 = vmax.f32 %v546, 0.0
        %v565 = vmax.f32 %v548, 0.0
        %v566 = vld [vmem:[%s3] sm:$0xff]
        %v567 = vld [vmem:[%s3 + $0x8] sm:$0xff]
        %v568 = vld [vmem:[%s3 + $0x10] sm:$0xff]
        %v569 = vld [vmem:[%s3 + $0x18] sm:$0xff]
        %v570 = vld [vmem:[%s3 + $0x20] sm:$0xff]
        %v571 = vld [vmem:[%s3 + $0x28] sm:$0xff]
        %v572 = vld [vmem:[%s3 + $0x30] sm:$0xff]
        %v573 = vld [vmem:[%s3 + $0x38] sm:$0xff]
        %575 = vset.pattern.permute.xlu0 0
        %576 = vperm.xlu0 %575, %v566
        %v577 = vpop.permute.xlu0 %576
        %580 = vset.pattern.permute.xlu0 0
        %581 = vperm.xlu0 %580, %v567
        %v582 = vpop.permute.xlu0 %581
        %585 = vset.pattern.permute.xlu0 0
        %586 = vperm.xlu0 %585, %v568
        %v587 = vpop.permute.xlu0 %586
        %590 = vset.pattern.permute.xlu0 0
        %591 = vperm.xlu0 %590, %v569
        %v592 = vpop.permute.xlu0 %591
        %595 = vset.pattern.permute.xlu0 0
        %596 = vperm.xlu0 %595, %v570
        %v597 = vpop.permute.xlu0 %596
        %600 = vset.pattern.permute.xlu0 0
        %601 = vperm.xlu0 %600, %v571
        %v602 = vpop.permute.xlu0 %601
        %605 = vset.pattern.permute.xlu0 0
        %606 = vperm.xlu0 %605, %v572
        %v607 = vpop.permute.xlu0 %606
        %610 = vset.pattern.permute.xlu0 0
        %611 = vperm.xlu0 %610, %v573
        %v612 = vpop.permute.xlu0 %611
        %v614 = vmul.f32 %v550, %v577
        %v615 = vmul.f32 %v551, %v577
        %v616 = vmul.f32 %v552, %v582
        %v617 = vmul.f32 %v553, %v582
        %v618 = vmul.f32 %v554, %v587
        %v619 = vmul.f32 %v555, %v587
        %v620 = vmul.f32 %v556, %v592
        %v621 = vmul.f32 %v557, %v592
        %v622 = vmul.f32 %v558, %v597
        %v623 = vmul.f32 %v559, %v597
        %v624 = vmul.f32 %v560, %v602
        %v625 = vmul.f32 %v561, %v602
        %v626 = vmul.f32 %v562, %v607
        %v627 = vmul.f32 %v563, %v607
        %v628 = vmul.f32 %v564, %v612
        %v629 = vmul.f32 %v565, %v612
        %v630 = vadd.f32 %v614, %v616
        %v631 = vadd.f32 %v630, %v618
        %v632 = vadd.f32 %v631, %v620
        %v633 = vadd.f32 %v632, %v622
        %v634 = vadd.f32 %v633, %v624
        %v635 = vadd.f32 %v634, %v626
        %v636 = vadd.f32 %v635, %v628
        %v637 = vrot.slane %v636, 4
        %v638 = vadd.f32 %v636, %v637
        %v639 = vrot.slane %v638, 2
        %v640 = vadd.f32 %v638, %v639
        %v641 = vrot.slane %v640, 1
        %v642 = vadd.f32 %v640, %v641
        %v643 = vadd.f32 %v615, %v617
        %v644 = vadd.f32 %v643, %v619
        %v645 = vadd.f32 %v644, %v621
        %v646 = vadd.f32 %v645, %v623
        %v647 = vadd.f32 %v646, %v625
        %v648 = vadd.f32 %v647, %v627
        %v649 = vadd.f32 %v648, %v629
        %v650 = vrot.slane %v649, 4
        %v651 = vadd.f32 %v649, %v650
        %v652 = vrot.slane %v651, 2
        %v653 = vadd.f32 %v651, %v652
        %v654 = vrot.slane %v653, 1
        %v655 = vadd.f32 %v653, %v654
        %s656 = sld [smem:[#allocation2]]
        %v657 = vstv %s656
        %v658 = vadd.f32 %v642, %v657
        %v659 = vadd.f32 %v655, %v657
        %v660 = vsub.f32 0.0, %v658
        %v661 = vsub.f32 0.0, %v659
        %v662 = vmul.f32 %v660, 1.442695
        %v663 = vpow.pop %v662
        %v664 = vmul.f32 %v661, 1.442695
        %v665 = vpow.pop %v664
        %v666 = vadd.f32 %v663, 1.0
        %v667 = vadd.f32 %v665, 1.0
        %v668 = vrcp.pop %v666
        %v669 = vmul.f32 1.0, %v668
        %v670 = vrcp.pop %v667
        %v671 = vmul.f32 1.0, %v670
        %v674 = vcombine.low %v669, %v671
        %v676 = vunpack.c.l.s4 1966171168
        %v677 = vunpack.c.0.s8 %v676
        %v678 = vlaneseq
        %v679 = vshrl.u32 %v678, 7
        %v680 = vsub.s32 %v677, %v679
        %v681 = vrot.slane %v674, %v680
        %v683 = vunpack.c.l.s4 1966171168
        %v684 = vunpack.c.0.s8 %v683
        %v685 = vlaneseq
        %v686 = vshrl.u32 %v685, 7
        %v687 = vsub.s32 %v684, %v686
        %v688 = vrot.slane %v681, %v687
        %v690 = vlaneseq
        %vm691 = vcmp.ge.s32.totalorder %v690, 0
        %vm692 = vcmp.lt.s32.totalorder %v690, 256
        %vm693 = vmand %vm691, %vm692
        %694 = vst.msk [vmem:[%s219] sm:$0x3] %vm693, %v688
        %s695 = sand.u32 %s138, 1
        %s696 = scalar_lea.sflag [#allocation4], %s695
        %s697 = sand.u32 %s138, 1
        %s698 = smul.addr %s697, 2
        %s699 = scalar_lea.vmem [#allocation3], %s698
        // Predicated region
        $region41: #{attack_model_forward.1} parent=39 // pred_check
          %p700 = pneg %p148
        $region42: #{attack_model_forward.1} parent=39 // pred_check_branch
          %702 = sbr.rel (%p700) target = $region44
        $region43: #{attack_model_forward.1} parent=39 // pred_region
          %s703 = smul.u32 2, %s20
          %s705 = ssub.s32 32, 32
          %706 = vsyncadd %s696, %s705
          %s707 = smul.addr %s703, 16
          %s708 = scalar_lea.hbm %s5, %s707
          %s710 = sshll.u32 %s699, 4
          %s711 = int_to_ptr.vmem [resolvable:$true] %s710
          %713 = dma.vmem_to_hbm [thread:$0]  %s711, 32, %s708, %s696
        $region44: #{attack_model_forward.1} parent=39 // pred_fallthru
          _
      $region40: #{attack_model_forward.1} parent=5 // pred_fallthru
        _
      %p714 = scmp.le.s32.totalorder 2, %s15
      // Predicated region
      $region45: #{attack_model_forward.1} parent=5 // pred_check
        %p715 = pneg %p714
      $region46: #{attack_model_forward.1} parent=5 // pred_check_branch
        %717 = sbr.rel (%p715) target = $region48
      $region47: #{attack_model_forward.1} parent=5 // pred_region
        %s718 = ssub.s32 %s15, 2
        // Predicated region
        $region49: #{attack_model_forward.1} parent=47 // pred_check
          %p719 = pneg %p154
        $region50: #{attack_model_forward.1} parent=47 // pred_check_branch
          %721 = sbr.rel (%p719) target = $region52
        $region51: #{attack_model_forward.1} parent=47 // pred_region
          %s722 = sand.u32 %s139, 1
          %s723 = scalar_lea.sflag [#allocation4], %s722
          %s724 = sand.u32 %s139, 1
          %s725 = smul.addr %s724, 2
          %s726 = scalar_lea.vmem [#allocation3], %s725
          %727 = dma.done %s723, 32
        $region52: #{attack_model_forward.1} parent=47 // pred_fallthru
          _
      $region48: #{attack_model_forward.1} parent=5 // pred_fallthru
        _
    $region6: #{attack_model_forward.1} parent=1 // loop_footer
      %s19 = sadd.s32 1, %s15
    $region7: #{attack_model_forward.1} parent=1 // loop_footer_branch
      %14 = sbr.rel target = $region3
    $region8: #{attack_model_forward.1} parent=1 // loop_exit
      _
    %728 = vsyncpa [#allocation4], 1
    %s729 = scalar_lea.sflag [#allocation4], 1
    %730 = vsyncpa %s729, 1

</llo_original>
